<compile_context>
chip_gen: v7x
topology: tpu7x:2x2x1
jax: 0.10.0
libtpu: 0.0.40
codegen_flags: <defaults>
</compile_context>

<pallas_src>
import functools

import jax
import jax.numpy as jnp
from jax.experimental import pallas as pl
from jax.experimental.pallas import tpu as pltpu

_LANES = 128
_SUBLANES = 8
_MAX_TILE_ROWS = 1024   # 1024 x 128 f32 = 512 KiB per input per grid step
_NUM_SPLITS = 2         # megacore split for v7x (2 TCs); harmless on v5e/v6e


def _tree_sum_row_groups(x, tile_rows):
    """Sum a (tile_rows, 128) f32 value down to (8, 128) with a pairwise tree.

    All slices start at multiples of 8 sublanes, so this is pure elementwise VPU
    work (no cross-lane XLU traffic, no VMEM relayout copies) and has good ILP.
    """
    parts = [x[r0:r0 + _SUBLANES, :] for r0 in range(0, tile_rows, _SUBLANES)]
    while len(parts) > 1:
        nxt = [parts[j] + parts[j + 1] for j in range(0, len(parts) - 1, 2)]
        if len(parts) % 2:
            nxt.append(parts[-1])
        parts = nxt
    return parts[0]


def _kd_mse_kernel(s_ref, t_ref, o_ref, *, tile_rows, rows, steps_per_split,
                   needs_mask):
    """Accumulate per-split partial sums of (s - t)^2 into an (8, 128) f32 block.

    s_ref, t_ref : VMEM tiles (tile_rows, 128) of the flattened inputs (native dtype)
    o_ref        : VMEM (8, 128) f32 output block, resident across the inner axis
    """
    i = pl.program_id(1)          # inner ("arbitrary") reduction axis

    @pl.when(i == 0)
    def _():
        o_ref[...] = jnp.zeros_like(o_ref)

    d = s_ref[...].astype(jnp.float32) - t_ref[...].astype(jnp.float32)
    sq = d * d

    if needs_mask:
        # Zero out rows past the real data (ragged trailing block / extra split).
        c = pl.program_id(0)
        row0 = (c * steps_per_split + i) * tile_rows
        row_ids = row0 + jax.lax.broadcasted_iota(jnp.int32, (tile_rows, _LANES), 0)
        sq = jnp.where(row_ids < rows, sq, 0.0)

    o_ref[...] += _tree_sum_row_groups(sq, tile_rows)


def kd_mse_loss(feat_stu, feat_tea, labels=None, temperature=8.0, ignore_label=-1):
    """Pallas implementation of KDMSELoss.forward (labels/temperature unused)."""
    assert feat_stu.shape == feat_tea.shape, "student/teacher feature shapes must match"
    n = int(feat_stu.size)

    s_flat = jnp.ravel(feat_stu)
    t_flat = jnp.ravel(feat_tea)

    n_main = (n // _LANES) * _LANES
    rows = n_main // _LANES

    # Tiny inputs (< 8 full lanes): not worth a kernel launch.
    if rows < _SUBLANES:
        d = s_flat.astype(jnp.float32) - t_flat.astype(jnp.float32)
        return jnp.sum(d * d) / jnp.float32(n)

    tail = n - n_main
    if tail:
        td = s_flat[n_main:].astype(jnp.float32) - t_flat[n_main:].astype(jnp.float32)
        tail_sse = jnp.sum(td * td)
        s_main, t_main = s_flat[:n_main], t_flat[:n_main]
    else:
        tail_sse = jnp.float32(0.0)
        s_main, t_main = s_flat, t_flat   # no copy: reshape of contiguous data is free

    s2d = s_main.reshape(rows, _LANES)
    t2d = t_main.reshape(rows, _LANES)

    # Tile rows: multiple of 8, never larger than the slab (only trailing blocks
    # can be partial -> standard boundary-block handling + in-kernel mask).
    tile_rows = min(_MAX_TILE_ROWS, (rows // _SUBLANES) * _SUBLANES)
    total_blocks = pl.cdiv(rows, tile_rows)
    num_splits = _NUM_SPLITS if total_blocks >= _NUM_SPLITS else 1
    steps_per_split = pl.cdiv(total_blocks, num_splits)
    needs_mask = (num_splits * steps_per_split * tile_rows) != rows
    needs_clamp = (num_splits * steps_per_split) != total_blocks
    max_block = total_blocks - 1

    def in_index_map(c, i):
        blk = c * steps_per_split + i
        if needs_clamp:
            blk = jnp.minimum(blk, max_block)   # extra split steps re-read last block (masked)
        return (blk, 0)

    kernel = functools.partial(
        _kd_mse_kernel,
        tile_rows=tile_rows,
        rows=rows,
        steps_per_split=steps_per_split,
        needs_mask=needs_mask,
    )

    in_bytes = (jnp.dtype(feat_stu.dtype).itemsize
                + jnp.dtype(feat_tea.dtype).itemsize) * n_main
    cost = pl.CostEstimate(
        flops=3 * n_main,
        transcendentals=0,
        bytes_accessed=in_bytes + num_splits * _SUBLANES * _LANES * 4,
    )

    partials = pl.pallas_call(
        kernel,
        out_shape=jax.ShapeDtypeStruct((num_splits, _SUBLANES, _LANES), jnp.float32),
        grid_spec=pltpu.PrefetchScalarGridSpec(
            num_scalar_prefetch=0,
            grid=(num_splits, steps_per_split),
            in_specs=[
                pl.BlockSpec((tile_rows, _LANES), in_index_map),
                pl.BlockSpec((tile_rows, _LANES), in_index_map),
            ],
            out_specs=pl.BlockSpec((None, _SUBLANES, _LANES), lambda c, i: (c, 0, 0)),
        ),
        compiler_params=pltpu.CompilerParams(
            dimension_semantics=("parallel", "arbitrary"),
        ),
        cost_estimate=cost,
    )(s2d, t2d)

    return (jnp.sum(partials) + tail_sse) / jnp.float32(n)


if __name__ == "__main__":
    key = jax.random.PRNGKey(0)
    k1, k2, k3 = jax.random.split(key, 3)

    # 1) Small NCHW feature maps, consistent with a segmentation-KD setup.
    feat_stu = jax.random.normal(k1, (2, 4, 16, 16), dtype=jnp.float32)
    feat_tea = jax.random.normal(k2, (2, 4, 16, 16), dtype=jnp.float32)
    labels = jax.random.randint(k3, (2, 16, 16), 0, 4)   # unused by forward

    loss = jax.block_until_ready(kd_mse_loss(feat_stu, feat_tea, labels))
    ref = jnp.mean((feat_stu - feat_tea) ** 2)
    assert jnp.allclose(loss, ref, rtol=1e-5, atol=1e-6), (loss, ref)

    # 2) Larger map that exercises the 2-way split, a partial trailing block
    #    and the in-kernel row mask.
    a = jax.random.normal(k1, (2, 8, 96, 96), dtype=jnp.float32)
    b = jax.random.normal(k2, (2, 8, 96, 96), dtype=jnp.float32)
    loss2 = jax.block_until_ready(kd_mse_loss(a, b))
    ref2 = jnp.mean((a - b) ** 2)
    assert jnp.allclose(loss2, ref2, rtol=1e-5, atol=1e-6), (loss2, ref2)

    # 3) Odd element count: exercises the <128-element plain-JAX tail epilogue.
    c_ = jax.random.normal(k1, (3, 5, 7, 11), dtype=jnp.float32)
    d_ = jax.random.normal(k2, (3, 5, 7, 11), dtype=jnp.float32)
    loss3 = jax.block_until_ready(kd_mse_loss(c_, d_))
    ref3 = jnp.mean((c_ - d_) ** 2)
    assert jnp.allclose(loss3, ref3, rtol=1e-5, atol=1e-6), (loss3, ref3)

    print("KERNEL_OK")
</pallas_src>

<mosaic_0001>
module attributes {stable_mosaic.version = 11 : i64} {
  func.func @_kd_mse_kernel(%arg0: i32, %arg1: i32, %arg2: memref<16x128xf32, #tpu.memory_space<vmem>>, %arg3: memref<16x128xf32, #tpu.memory_space<vmem>>, %arg4: memref<1x8x128xf32, #tpu.memory_space<vmem>>) attributes {dimension_semantics = [#tpu.dimension_semantics<parallel>, #tpu.dimension_semantics<arbitrary>], iteration_bounds = array<i64: 1, 1>, scalar_prefetch = 0 : i64, scratch_operands = 0 : i64, tpu.core_type = #tpu.core_type<tc>, window_params = [{transform_indices = @transform_0, window_bounds = array<i64: 16, 128>}, {transform_indices = @transform_1, window_bounds = array<i64: 16, 128>}, {transform_indices = @transform_2, window_bounds = array<i64: 1, 8, 128>}]} {
    %c0_i32 = arith.constant 0 : i32
    %0 = arith.cmpi eq, %arg1, %c0_i32 : i32
    %1 = arith.extui %0 : i1 to i32
    %c0_i32_0 = arith.constant 0 : i32
    %2 = arith.cmpi ne, %1, %c0_i32_0 : i32
    scf.if %2 {
      %cst = arith.constant 0.000000e+00 : f32
      %16 = vector.broadcast %cst : f32 to vector<8x128xf32>
      %c0_10 = arith.constant 0 : index
      %c0_11 = arith.constant 0 : index
      %c0_12 = arith.constant 0 : index
      %17 = vector.load %arg4[%c0_10, %c0_11, %c0_12] : memref<1x8x128xf32, #tpu.memory_space<vmem>>, vector<1x8x128xf32>
      %18 = vector.shape_cast %17 : vector<1x8x128xf32> to vector<8x128xf32>
      %19 = vector.shape_cast %16 : vector<8x128xf32> to vector<1x8x128xf32>
      tpu.vector_store %arg4[%c0_10, %c0_11, %c0_12], %19 {strides = array<i32>} : memref<1x8x128xf32, #tpu.memory_space<vmem>>, vector<1x8x128xf32>,
    } else {
    }
    %c0 = arith.constant 0 : index
    %c0_1 = arith.constant 0 : index
    %3 = vector.load %arg2[%c0, %c0_1] : memref<16x128xf32, #tpu.memory_space<vmem>>, vector<16x128xf32>
    %c0_2 = arith.constant 0 : index
    %c0_3 = arith.constant 0 : index
    %4 = vector.load %arg3[%c0_2, %c0_3] : memref<16x128xf32, #tpu.memory_space<vmem>>, vector<16x128xf32>
    %5 = arith.subf %3, %4 : vector<16x128xf32>
    %6 = arith.mulf %5, %5 : vector<16x128xf32>
    %c0_4 = arith.constant 0 : index
    %c0_5 = arith.constant 0 : index
    %c0_6 = arith.constant 0 : index
    %7 = vector.load %arg4[%c0_4, %c0_5, %c0_6] : memref<1x8x128xf32, #tpu.memory_space<vmem>>, vector<1x8x128xf32>
    %8 = vector.shape_cast %7 : vector<1x8x128xf32> to vector<8x128xf32>
    %9 = vector.extract_strided_slice %6 {offsets = [0, 0], sizes = [8, 128], strides = [1, 1]} : vector<16x128xf32> to vector<8x128xf32>
    %10 = vector.extract_strided_slice %6 {offsets = [8, 0], sizes = [8, 128], strides = [1, 1]} : vector<16x128xf32> to vector<8x128xf32>
    %11 = arith.addf %9, %10 : vector<8x128xf32>
    %12 = arith.addf %8, %11 : vector<8x128xf32>
    %c0_7 = arith.constant 0 : index
    %c0_8 = arith.constant 0 : index
    %c0_9 = arith.constant 0 : index
    %13 = vector.load %arg4[%c0_7, %c0_8, %c0_9] : memref<1x8x128xf32, #tpu.memory_space<vmem>>, vector<1x8x128xf32>
    %14 = vector.shape_cast %13 : vector<1x8x128xf32> to vector<8x128xf32>
    %15 = vector.shape_cast %12 : vector<8x128xf32> to vector<1x8x128xf32>
    tpu.vector_store %arg4[%c0_7, %c0_8, %c0_9], %15 {strides = array<i32>} : memref<1x8x128xf32, #tpu.memory_space<vmem>>, vector<1x8x128xf32>,
    return
  }
  func.func @transform_0(%arg0: i32, %arg1: i32) -> (i32, i32) {
    %c1_i32 = arith.constant 1 : i32
    %0 = arith.muli %arg0, %c1_i32 : i32
    %1 = arith.addi %0, %arg1 : i32
    %c0_i32 = arith.constant 0 : i32
    %c0_i32_0 = arith.constant 0 : i32
    return %1, %c0_i32 : i32, i32
  }
  func.func @transform_1(%arg0: i32, %arg1: i32) -> (i32, i32) {
    %c1_i32 = arith.constant 1 : i32
    %0 = arith.muli %arg0, %c1_i32 : i32
    %1 = arith.addi %0, %arg1 : i32
    %c0_i32 = arith.constant 0 : i32
    %c0_i32_0 = arith.constant 0 : i32
    return %1, %c0_i32 : i32, i32
  }
  func.func @transform_2(%arg0: i32, %arg1: i32) -> (i32, i32, i32) {
    %c0_i32 = arith.constant 0 : i32
    %c0_i32_0 = arith.constant 0 : i32
    %c0_i32_1 = arith.constant 0 : i32
    return %arg0, %c0_i32, %c0_i32_0 : i32, i32, i32
  }
}

</mosaic_0001>

<llo_original>
// kernel: tpu_custom_call.1
$region0: #{tpu_custom_call.1}
  #allocation0 [shape = 'u32[]', space=smem, size = 0x4, offset = 0x4, fixed_abs, tag = 'smem constant byte address 0x4 - core index']
  #allocation1 [shape = 'u32[144,128]{1,0:T(1,128)}', space=vmem, size = 0x12000, scoped, tag = 'internal scratch']
  %s0 = inlined_call_operand.hbm [shape: f32[16,128], index: 0, kind: input, shape index: {}]
  %s1 = inlined_call_operand.hbm [shape: f32[16,128], index: 1, kind: input, shape index: {}]
  %s2 = inlined_call_operand.hbm [shape: f32[1,8,128], index: 2, kind: output, shape index: {}]
  %s3 = sld [smem:[#allocation0]]
  $region30: #{tpu_custom_call.1} parent=0
    _
  %s5 = ssub.s32 1, %s3
  %s6 = scalar_select 0, %s5, %s3
  $region1: #{tpu_custom_call.1} parent=0
    #allocation2 [shape = 'u8[8192]{0}', space=vmem, size = 0x2000, scoped, tag = 'input window, operand 0, single buffered']
    #allocation3 [shape = 's32[1]{0}', space=sflag, size = 0x4, scoped, tag = 'scoped memory for tpu_custom_call.1']
    #allocation4 [shape = 's32[1]{0}', space=sflag, size = 0x4, scoped, tag = 'scoped memory for tpu_custom_call.1']
    #allocation5 [shape = 'u8[8192]{0}', space=vmem, size = 0x2000, scoped, tag = 'input window, operand 1, single buffered']
    #allocation6 [shape = 's32[1]{0}', space=sflag, size = 0x4, scoped, tag = 'scoped memory for tpu_custom_call.1']
    #allocation7 [shape = 'u8[4096]{0}', space=vmem, size = 0x1000, scoped, tag = 'output window, operand 0, single buffered']
    %7 = vsyncpa [#allocation3], 0
    %8 = vsyncpa [#allocation6], 0
    %9 = vsyncpa [#allocation4], 0
    // Predicated region
    $region2: #{tpu_custom_call.1} parent=1 // pred_check
      _
    $region3: #{tpu_custom_call.1} parent=1 // pred_check_branch
      %11 = sbr.rel (0) target = $region5
    $region4: #{tpu_custom_call.1} parent=1 // pred_region
      %s12 = sadd.s32 0, 0
      %s13 = smul.u32 2, %s12
      %s15 = ssub.s32 256, 256
      %16 = vsyncadd [#allocation3], %s15
      %s17 = smul.addr %s13, 128
      %s18 = scalar_lea.hbm %s0, %s17
      %s19 = sshll.u32 [#allocation2], 4
      %s20 = int_to_ptr.vmem [resolvable:$true] %s19
      %25 = dma.hbm_to_vmem [thread:$0]  %s18, 256, %s20, [#allocation3], 128, 128, 8
    $region5: #{tpu_custom_call.1} parent=1 // pred_fallthru
      _
    // Predicated region
    $region6: #{tpu_custom_call.1} parent=1 // pred_check
      _
    $region7: #{tpu_custom_call.1} parent=1 // pred_check_branch
      %27 = sbr.rel (0) target = $region9
    $region8: #{tpu_custom_call.1} parent=1 // pred_region
      %s28 = sadd.s32 0, 0
      %s29 = smul.u32 2, %s28
      %s31 = ssub.s32 256, 256
      %32 = vsyncadd [#allocation6], %s31
      %s33 = smul.addr %s29, 128
      %s34 = scalar_lea.hbm %s1, %s33
      %s35 = sshll.u32 [#allocation5], 4
      %s36 = int_to_ptr.vmem [resolvable:$true] %s35
      %41 = dma.hbm_to_vmem [thread:$0]  %s34, 256, %s36, [#allocation6], 128, 128, 8
    $region9: #{tpu_custom_call.1} parent=1 // pred_fallthru
      _
    // Predicated region
    $region10: #{tpu_custom_call.1} parent=1 // pred_check
      _
    $region11: #{tpu_custom_call.1} parent=1 // pred_check_branch
      %43 = sbr.rel (0) target = $region13
    $region12: #{tpu_custom_call.1} parent=1 // pred_region
      %44 = dma.done [#allocation3], 256
    $region13: #{tpu_custom_call.1} parent=1 // pred_fallthru
      _
    // Predicated region
    $region14: #{tpu_custom_call.1} parent=1 // pred_check
      _
    $region15: #{tpu_custom_call.1} parent=1 // pred_check_branch
      %46 = sbr.rel (0) target = $region17
    $region16: #{tpu_custom_call.1} parent=1 // pred_region
      %47 = dma.done [#allocation6], 256
    $region17: #{tpu_custom_call.1} parent=1 // pred_fallthru
      _
    %s48 = sadd.s32 0, 0
    %s49 = smul.u32 2, %s48
    %s50 = sadd.s32 0, 0
    %s51 = smul.u32 2, %s50
    %p52 = scmp.eq.s32.totalorder 0, 0
    // Predicated region
    $region18: #{tpu_custom_call.1} parent=1 // pred_check
      %p53 = pneg %p52
    $region19: #{tpu_custom_call.1} parent=1 // pred_check_branch
      %55 = sbr.rel (%p53) target = $region21
    $region20: #{tpu_custom_call.1} parent=1 // pred_region
      %56 = vst [vmem:[#allocation7] sm:$0xff] 0.0
    $region21: #{tpu_custom_call.1} parent=1 // pred_fallthru
      _
    %v57 = vld [vmem:[#allocation2] sm:$0xff]
    %v58 = vld [vmem:[#allocation2 + $0x8] sm:$0xff]
    %v59 = vld [vmem:[#allocation5] sm:$0xff]
    %v60 = vld [vmem:[#allocation5 + $0x8] sm:$0xff]
    %v61 = vsub.f32 %v57, %v59
    %v62 = vsub.f32 %v58, %v60
    %v63 = vmul.f32 %v61, %v61
    %v64 = vmul.f32 %v62, %v62
    %v65 = vld [vmem:[#allocation7] sm:$0xff]
    %v66 = vadd.f32 %v63, %v64
    %v67 = vadd.f32 %v65, %v66
    %68 = vst [vmem:[#allocation7] sm:$0xff] %v67
    // Predicated region
    $region22: #{tpu_custom_call.1} parent=1 // pred_check
      _
    $region23: #{tpu_custom_call.1} parent=1 // pred_check_branch
      %70 = sbr.rel (0) target = $region25
    $region24: #{tpu_custom_call.1} parent=1 // pred_region
      %s72 = ssub.s32 128, 128
      %73 = vsyncadd [#allocation4], %s72
      %s75 = sshll.u32 [#allocation7], 4
      %s76 = int_to_ptr.vmem [resolvable:$true] %s75
      %78 = dma.vmem_to_hbm [thread:$0]  %s76, 128, %s2, [#allocation4]
    $region25: #{tpu_custom_call.1} parent=1 // pred_fallthru
      _
    // Predicated region
    $region26: #{tpu_custom_call.1} parent=1 // pred_check
      _
    $region27: #{tpu_custom_call.1} parent=1 // pred_check_branch
      %80 = sbr.rel (0) target = $region29
    $region28: #{tpu_custom_call.1} parent=1 // pred_region
      %81 = dma.done [#allocation4], 128
    $region29: #{tpu_custom_call.1} parent=1 // pred_fallthru
      _
    %82 = vsyncpa [#allocation3], 1
    %83 = vsyncpa [#allocation6], 1
    %84 = vsyncpa [#allocation4], 1

</llo_original>
